<compile_context>
chip_gen: v5e
topology: v5e:2x2
jax: 0.10.0
libtpu: 0.0.40
codegen_flags: <defaults>
</compile_context>

<pallas_src>
import numpy as np
import jax
import jax.numpy as jnp
from jax import lax
from jax.experimental import pallas as pl
from jax.experimental.pallas import tpu as pltpu

WINDOW = 11
SIGMA = 1.5
C1 = 0.01 ** 2
C2 = 0.03 ** 2
SILOG_LAMBD = 0.5   # standard SiLogLoss lambda
ALPHA = 0.1         # L1 weight       (declared, unused by the module forward)
BETA = 0.2          # SSIM weight
GAMMA = 0.05        # gradient weight (declared, unused by the module forward)
DELTA = 1.0         # SiLog weight


# ---------------------------------------------------------------------------
# numerics helpers (only exp/log/min/abs -> guaranteed Mosaic lowering)
# ---------------------------------------------------------------------------
def _sigmoid(x):
    # matches torch.sigmoid including underflow to exactly 0 for x << 0
    return 1.0 / (1.0 + jnp.exp(-x))


def _log_sigmoid(x):
    # stable log(sigmoid(x)); never -inf even when sigmoid underflows
    return jnp.minimum(x, 0.0) - jnp.log(1.0 + jnp.exp(-jnp.abs(x)))


# ---------------------------------------------------------------------------
# Pallas kernel: one grid step processes bt full images and emits partial sums
# ---------------------------------------------------------------------------
def _combined_loss_kernel(pred_ref, target_ref, gh_ref, gw_ref, out_ref):
    bt, H, W = pred_ref.shape
    n = 5 * bt

    # native-dtype inputs -> f32 once, flattened to lane-friendly 2-D views
    praw = pred_ref[...].astype(jnp.float32).reshape(bt * H, W)
    traw = target_ref[...].astype(jnp.float32).reshape(bt * H, W)
    p = _sigmoid(praw)
    t = _sigmoid(traw)

    # ----- SiLog partial sums (valid_mask = sigmoid(target) > 0, per module) --
    valid = t > 0.0
    dl = jnp.where(valid, _log_sigmoid(traw) - _log_sigmoid(praw), 0.0)
    s_dl = jnp.sum(dl)
    s_dl2 = jnp.sum(dl * dl)
    s_cnt = jnp.sum(valid.astype(jnp.float32))

    # ----- SSIM: separable 11-tap Gaussian blur as two band-matrix matmuls ----
    bf = jnp.bfloat16
    # 5 blur channels stacked along rows, built directly in bf16 (single copy)
    stack = jnp.concatenate(
        [p.astype(bf), t.astype(bf), (p * p).astype(bf),
         (t * t).astype(bf), (p * t).astype(bf)], axis=0)         # (5*bt*H, W)

    gw = gw_ref[...]                                              # (W, W) bf16
    gh = gh_ref[...]                                              # (H, H) bf16

    # blur along W (lane axis): one MXU matmul, M = 5*bt*H, f32 accumulation
    y = jnp.dot(stack, gw, preferred_element_type=jnp.float32)    # (5*bt*H, W)

    # blur along H: minor-dim transpose (XLU slot, off the MXU/VPU path) so the
    # H axis becomes the contraction axis of ONE un-batched matmul, M = 5*bt*W.
    # gh is symmetric, so no transpose of the band matrix is needed.
    yt = jnp.swapaxes(y.reshape(n, H, W), 1, 2)                   # (n, W, H) f32
    z = jnp.dot(yt.astype(bf).reshape(n * W, H), gh,
                preferred_element_type=jnp.float32)               # (n*W, H) f32

    # SSIM element-wise math stays in the transposed layout; the final sum is
    # layout-agnostic so no transpose back is required.
    m = bt * W
    mu1 = z[0 * m:1 * m]
    mu2 = z[1 * m:2 * m]
    bpp = z[2 * m:3 * m]
    btt = z[3 * m:4 * m]
    bpt = z[4 * m:5 * m]

    mu1_sq = mu1 * mu1
    mu2_sq = mu2 * mu2
    mu1_mu2 = mu1 * mu2
    sigma1_sq = bpp - mu1_sq
    sigma2_sq = btt - mu2_sq
    sigma12 = bpt - mu1_mu2

    num = (2.0 * mu1_mu2 + C1) * (2.0 * sigma12 + C2)
    den = (mu1_sq + mu2_sq + C1) * (sigma1_sq + sigma2_sq + C2)
    ssim_map = num * pl.reciprocal(den, approx=True)              # EUP slot
    s_ssim = jnp.sum(ssim_map)

    # ----- write the 4 partial sums into one aligned (8,128) output tile ------
    lane = lax.broadcasted_iota(jnp.int32, (8, 128), 1)
    tile = (jnp.where(lane == 0, s_dl, 0.0)
            + jnp.where(lane == 1, s_dl2, 0.0)
            + jnp.where(lane == 2, s_cnt, 0.0)
            + jnp.where(lane == 3, s_ssim, 0.0))
    out_ref[0] = tile.astype(out_ref.dtype)


# ---------------------------------------------------------------------------
# Gaussian window / band matrices
# ---------------------------------------------------------------------------
def _gaussian_1d(window_size, sigma):
    x = np.arange(window_size) - window_size // 2
    g = np.exp(-(x.astype(np.float64) ** 2) / (2.0 * sigma ** 2))
    return (g / g.sum()).astype(np.float32)


def _band_matrix(n, g):
    # M[i, j] = g[j - i + r] if |j - i| <= r else 0 (zero "same" padding).
    # Symmetric for a symmetric Gaussian window.
    k = len(g)
    r = k // 2
    i = np.arange(n)[:, None]
    j = np.arange(n)[None, :]
    d = j - i + r
    valid = (d >= 0) & (d < k)
    return np.where(valid, g[np.clip(d, 0, k - 1)], 0.0).astype(np.float32)


# ---------------------------------------------------------------------------
# Hardware-aware sizing helpers
# ---------------------------------------------------------------------------
def _physical_vmem_bytes():
    try:
        info = pltpu.get_tpu_info()
        v = getattr(info, "vmem_capacity_bytes", None)
        if v:
            return int(v)
    except Exception:
        pass
    return 64 << 20   # conservative fallback (v7x per-TensorCore VMEM)


def _num_tensorcores():
    """TensorCores sharing the Pallas grid behind one device (megacore/v7x)."""
    try:
        kind = jax.devices()[0].device_kind.lower()
    except Exception:
        return 1
    if ("v5 lite" in kind) or ("v5e" in kind) or ("v6" in kind):
        return 1
    if any(tag in kind for tag in ("v4", "v5p", "v7")):
        return 2
    return 1


def _pick_block_batch(B, H, W, budget_bytes, in_bytes, num_cores):
    # ~160 B/pixel of f32+bf16 kernel temporaries per image per step, plus the
    # double-buffered native-dtype input blocks.
    per_img = (160 + 4 * in_bytes) * H * W + 1
    bt = max(1, min(B, budget_bytes // per_img))
    if num_cores >= 2 and B >= 2:
        bt = min(bt, max(1, B // 2))          # at least 2 grid steps
    while B % bt:
        bt -= 1
    if num_cores >= 2 and B >= 2 and (B // bt) % 2 != 0:
        cand = bt - 1                          # prefer an even step count
        while cand >= 1:
            if B % cand == 0 and (B // cand) % 2 == 0:
                bt = cand
                break
            cand -= 1
    return bt


def _const_block_spec(shape):
    """Grid-invariant operand: single-buffered when the API supports it."""
    idx = lambda s: (0, 0)
    try:
        return pl.BlockSpec(shape, idx, pipeline_mode=pl.Buffered(1))
    except (TypeError, AttributeError):
        return pl.BlockSpec(shape, idx)


# ---------------------------------------------------------------------------
# Wrapper
# ---------------------------------------------------------------------------
def combined_depth_loss(pred, target, block_batch=None):
    """pred, target: (B, 1, H, W) float arrays. Returns scalar f32 loss."""
    B, C, H, W = pred.shape
    assert C == 1, "CombinedDepthLoss expects single-channel depth maps"

    # keep the native dtype: the kernel casts to f32 internally, so bf16/f16
    # callers get half the input DMA for free.
    p = pred.reshape(B, H, W)
    t = target.reshape(B, H, W)
    in_bytes = int(np.dtype(pred.dtype).itemsize)

    vmem_phys = _physical_vmem_bytes()
    vmem_cap = (vmem_phys * 3) // 4          # ~25% headroom below physical
    num_tc = _num_tensorcores()

    if block_batch is None:
        bt = _pick_block_batch(B, H, W, vmem_cap // 2, in_bytes, num_tc)
    else:
        bt = block_batch
    nsteps = B // bt

    g1d = _gaussian_1d(WINDOW, SIGMA)
    gh = jnp.asarray(_band_matrix(H, g1d), dtype=jnp.bfloat16)
    gw = jnp.asarray(_band_matrix(W, g1d), dtype=jnp.bfloat16)

    est = (2 * 2 * bt * H * W * in_bytes     # pred/target blocks, double-buffered
           + 2 * (H * H + W * W)             # gh/gw (bf16, single-buffered)
           + 160 * bt * H * W)               # kernel temporaries (rough)
    vmem_limit = int(min(vmem_cap, max(32 << 20, (est * 3) // 2)))

    partial = pl.pallas_call(
        _combined_loss_kernel,
        out_shape=jax.ShapeDtypeStruct((nsteps, 8, 128), jnp.float32),
        grid_spec=pltpu.PrefetchScalarGridSpec(
            num_scalar_prefetch=0,
            grid=(nsteps,),
            in_specs=[
                pl.BlockSpec((bt, H, W), lambda s: (s, 0, 0)),   # pred (native dtype)
                pl.BlockSpec((bt, H, W), lambda s: (s, 0, 0)),   # target (native dtype)
                _const_block_spec((H, H)),                       # G_H band matrix
                _const_block_spec((W, W)),                       # G_W band matrix
            ],
            out_specs=pl.BlockSpec((1, 8, 128), lambda s: (s, 0, 0)),
        ),
        compiler_params=pltpu.CompilerParams(
            dimension_semantics=("parallel",),
            vmem_limit_bytes=vmem_limit),
    )(p, t, gh, gw)

    # tiny final combine of the per-step partial sums (plain JAX)
    sums = jnp.sum(partial[:, 0, 0:4], axis=0)
    s_dl, s_dl2, cnt, s_ssim = sums[0], sums[1], sums[2], sums[3]

    mean_dl = s_dl / cnt
    mean_dl2 = s_dl2 / cnt
    # clamp: fp cancellation can make the radicand fractionally negative
    loss_silog = jnp.sqrt(jnp.maximum(
        mean_dl2 - SILOG_LAMBD * mean_dl * mean_dl, 0.0))

    ssim_mean = s_ssim / float(B * H * W)
    loss_ssim = 1.0 - ssim_mean
    return BETA * loss_ssim + DELTA * loss_silog


# ---------------------------------------------------------------------------
# Pure-JAX f32 reference (same math, no Pallas) for a sanity check
# ---------------------------------------------------------------------------
def _reference_loss(pred, target):
    B, C, H, W = pred.shape
    p = jax.nn.sigmoid(pred.reshape(B, H, W).astype(jnp.float32))
    t = jax.nn.sigmoid(target.reshape(B, H, W).astype(jnp.float32))

    mask = t > 0.0
    dl = jnp.where(mask, jnp.log(t) - jnp.log(p), 0.0)
    n = jnp.sum(mask.astype(jnp.float32))
    silog = jnp.sqrt(jnp.sum(dl * dl) / n - SILOG_LAMBD * (jnp.sum(dl) / n) ** 2)

    g1d = _gaussian_1d(WINDOW, SIGMA)
    gh = jnp.asarray(_band_matrix(H, g1d))
    gw = jnp.asarray(_band_matrix(W, g1d))

    def blur(x):
        return jnp.einsum("hi,bij,wj->bhw", gh, x, gw,
                          precision=lax.Precision.HIGHEST)

    mu1, mu2 = blur(p), blur(t)
    s1 = blur(p * p) - mu1 * mu1
    s2 = blur(t * t) - mu2 * mu2
    s12 = blur(p * t) - mu1 * mu2
    ssim_map = ((2 * mu1 * mu2 + C1) * (2 * s12 + C2)) / (
        (mu1 * mu1 + mu2 * mu2 + C1) * (s1 + s2 + C2))
    loss_ssim = 1.0 - jnp.mean(ssim_map)
    return BETA * loss_ssim + DELTA * silog


if __name__ == "__main__":
    key = jax.random.PRNGKey(0)
    k1, k2 = jax.random.split(key)
    B, C, H, W = 2, 1, 16, 16
    pred = jax.random.normal(k1, (B, C, H, W), dtype=jnp.float32)
    target = jax.random.normal(k2, (B, C, H, W), dtype=jnp.float32)

    loss = jax.block_until_ready(combined_depth_loss(pred, target))
    ref = jax.block_until_ready(_reference_loss(pred, target))

    assert np.isfinite(float(loss)), "kernel produced non-finite loss"
    # tolerance covers the intentional bf16 blur + approx reciprocal in SSIM
    np.testing.assert_allclose(np.asarray(loss), np.asarray(ref),
                               rtol=2e-2, atol=5e-3)
    print("KERNEL_OK")
</pallas_src>

<mosaic_0001>
module attributes {stable_mosaic.version = 11 : i64} {
  func.func @_combined_loss_kernel(%arg0: i32, %arg1: memref<2x16x16xf32, #tpu.memory_space<vmem>>, %arg2: memref<2x16x16xf32, #tpu.memory_space<vmem>>, %arg3: memref<16x16xbf16, #tpu.memory_space<vmem>>, %arg4: memref<16x16xbf16, #tpu.memory_space<vmem>>, %arg5: memref<1x8x128xf32, #tpu.memory_space<vmem>>) attributes {dimension_semantics = [#tpu.dimension_semantics<parallel>], iteration_bounds = array<i64: 1>, scalar_prefetch = 0 : i64, scratch_operands = 0 : i64, tpu.core_type = #tpu.core_type<tc>, window_params = [{transform_indices = @transform_0, window_bounds = array<i64: 2, 16, 16>}, {transform_indices = @transform_1, window_bounds = array<i64: 2, 16, 16>}, {pipeline_mode = #tpu.pipeline_mode<synchronous>, transform_indices = @transform_2, window_bounds = array<i64: 16, 16>}, {pipeline_mode = #tpu.pipeline_mode<synchronous>, transform_indices = @transform_3, window_bounds = array<i64: 16, 16>}, {transform_indices = @transform_4, window_bounds = array<i64: 1, 8, 128>}]} {
    %c0 = arith.constant 0 : index
    %c0_0 = arith.constant 0 : index
    %c0_1 = arith.constant 0 : index
    %0 = vector.load %arg1[%c0, %c0_0, %c0_1] : memref<2x16x16xf32, #tpu.memory_space<vmem>>, vector<2x16x16xf32>
    %1 = vector.shape_cast %0 : vector<2x16x16xf32> to vector<32x16xf32>
    %c0_2 = arith.constant 0 : index
    %c0_3 = arith.constant 0 : index
    %c0_4 = arith.constant 0 : index
    %2 = vector.load %arg2[%c0_2, %c0_3, %c0_4] : memref<2x16x16xf32, #tpu.memory_space<vmem>>, vector<2x16x16xf32>
    %3 = vector.shape_cast %2 : vector<2x16x16xf32> to vector<32x16xf32>
    %cst = arith.constant 0.000000e+00 : f32
    %4 = vector.broadcast %cst : f32 to vector<32x16xf32>
    %5 = arith.subf %4, %1 : vector<32x16xf32>
    %6 = math.exp %5 : vector<32x16xf32>
    %cst_5 = arith.constant 1.000000e+00 : f32
    %7 = vector.broadcast %cst_5 : f32 to vector<32x16xf32>
    %8 = arith.addf %7, %6 : vector<32x16xf32>
    %cst_6 = arith.constant 1.000000e+00 : f32
    %9 = vector.broadcast %cst_6 : f32 to vector<32x16xf32>
    %10 = arith.divf %9, %8 : vector<32x16xf32>
    %cst_7 = arith.constant 0.000000e+00 : f32
    %11 = vector.broadcast %cst_7 : f32 to vector<32x16xf32>
    %12 = arith.subf %11, %3 : vector<32x16xf32>
    %13 = math.exp %12 : vector<32x16xf32>
    %cst_8 = arith.constant 1.000000e+00 : f32
    %14 = vector.broadcast %cst_8 : f32 to vector<32x16xf32>
    %15 = arith.addf %14, %13 : vector<32x16xf32>
    %cst_9 = arith.constant 1.000000e+00 : f32
    %16 = vector.broadcast %cst_9 : f32 to vector<32x16xf32>
    %17 = arith.divf %16, %15 : vector<32x16xf32>
    %cst_10 = arith.constant 0.000000e+00 : f32
    %18 = vector.broadcast %cst_10 : f32 to vector<32x16xf32>
    %19 = arith.cmpf ogt, %17, %18 : vector<32x16xf32>
    %cst_11 = arith.constant 0.000000e+00 : f32
    %20 = vector.broadcast %cst_11 : f32 to vector<32x16xf32>
    %21 = arith.minimumf %3, %20 : vector<32x16xf32>
    %22 = math.absf %3 : vector<32x16xf32>
    %cst_12 = arith.constant 0.000000e+00 : f32
    %23 = vector.broadcast %cst_12 : f32 to vector<32x16xf32>
    %24 = arith.subf %23, %22 : vector<32x16xf32>
    %25 = math.exp %24 : vector<32x16xf32>
    %cst_13 = arith.constant 1.000000e+00 : f32
    %26 = vector.broadcast %cst_13 : f32 to vector<32x16xf32>
    %27 = arith.addf %26, %25 : vector<32x16xf32>
    %28 = math.log %27 : vector<32x16xf32>
    %29 = arith.subf %21, %28 : vector<32x16xf32>
    %cst_14 = arith.constant 0.000000e+00 : f32
    %30 = vector.broadcast %cst_14 : f32 to vector<32x16xf32>
    %31 = arith.minimumf %1, %30 : vector<32x16xf32>
    %32 = math.absf %1 : vector<32x16xf32>
    %cst_15 = arith.constant 0.000000e+00 : f32
    %33 = vector.broadcast %cst_15 : f32 to vector<32x16xf32>
    %34 = arith.subf %33, %32 : vector<32x16xf32>
    %35 = math.exp %34 : vector<32x16xf32>
    %cst_16 = arith.constant 1.000000e+00 : f32
    %36 = vector.broadcast %cst_16 : f32 to vector<32x16xf32>
    %37 = arith.addf %36, %35 : vector<32x16xf32>
    %38 = math.log %37 : vector<32x16xf32>
    %39 = arith.subf %31, %38 : vector<32x16xf32>
    %40 = arith.subf %29, %39 : vector<32x16xf32>
    %cst_17 = arith.constant 0.000000e+00 : f32
    %41 = vector.broadcast %cst_17 : f32 to vector<32x16xf32>
    %42 = arith.select %19, %40, %41 : vector<32x16xi1>, vector<32x16xf32>
    %43 = vector.shape_cast %42 : vector<32x16xf32> to vector<1x32x16xf32>
    %cst_18 = arith.constant dense<0.000000e+00> : vector<1xf32>
    %44 = vector.multi_reduction <add>, %43, %cst_18 [1, 2] : vector<1x32x16xf32> to vector<1xf32>
    %45 = vector.shape_cast %44 : vector<1xf32> to vector<1x1x1xf32>
    %46 = vector.extract %45[0, 0, 0] : f32 from vector<1x1x1xf32>
    %47 = arith.mulf %42, %42 : vector<32x16xf32>
    %48 = vector.shape_cast %47 : vector<32x16xf32> to vector<1x32x16xf32>
    %cst_19 = arith.constant dense<0.000000e+00> : vector<1xf32>
    %49 = vector.multi_reduction <add>, %48, %cst_19 [1, 2] : vector<1x32x16xf32> to vector<1xf32>
    %50 = vector.shape_cast %49 : vector<1xf32> to vector<1x1x1xf32>
    %51 = vector.extract %50[0, 0, 0] : f32 from vector<1x1x1xf32>
    %52 = arith.extui %19 : vector<32x16xi1> to vector<32x16xi32>
    %53 = arith.sitofp %52 : vector<32x16xi32> to vector<32x16xf32>
    %54 = vector.shape_cast %53 : vector<32x16xf32> to vector<1x32x16xf32>
    %cst_20 = arith.constant dense<0.000000e+00> : vector<1xf32>
    %55 = vector.multi_reduction <add>, %54, %cst_20 [1, 2] : vector<1x32x16xf32> to vector<1xf32>
    %56 = vector.shape_cast %55 : vector<1xf32> to vector<1x1x1xf32>
    %57 = vector.extract %56[0, 0, 0] : f32 from vector<1x1x1xf32>
    %58 = arith.truncf %10 : vector<32x16xf32> to vector<32x16xbf16>
    %59 = arith.truncf %17 : vector<32x16xf32> to vector<32x16xbf16>
    %60 = arith.mulf %10, %10 : vector<32x16xf32>
    %61 = arith.truncf %60 : vector<32x16xf32> to vector<32x16xbf16>
    %62 = arith.mulf %17, %17 : vector<32x16xf32>
    %63 = arith.truncf %62 : vector<32x16xf32> to vector<32x16xbf16>
    %64 = arith.mulf %10, %17 : vector<32x16xf32>
    %65 = arith.truncf %64 : vector<32x16xf32> to vector<32x16xbf16>
    %66 = tpu.concatenate %58, %59, %61, %63, %65 in 0 : vector<32x16xbf16>, vector<32x16xbf16>, vector<32x16xbf16>, vector<32x16xbf16>, vector<32x16xbf16> -> vector<160x16xbf16>
    %c0_21 = arith.constant 0 : index
    %c0_22 = arith.constant 0 : index
    %67 = vector.load %arg4[%c0_21, %c0_22] : memref<16x16xbf16, #tpu.memory_space<vmem>>, vector<16x16xbf16>
    %c0_23 = arith.constant 0 : index
    %c0_24 = arith.constant 0 : index
    %68 = vector.load %arg3[%c0_23, %c0_24] : memref<16x16xbf16, #tpu.memory_space<vmem>>, vector<16x16xbf16>
    %cst_25 = arith.constant dense<0.000000e+00> : vector<160x16xf32>
    %69 = tpu.matmul %66, %67, %cst_25 {dimension_numbers = #tpu.dot_dimension_numbers<[1], [0], [0], [1], [0, 0, 1, 1], [], []>} : vector<160x16xbf16>, vector<16x16xbf16>, vector<160x16xf32> -> vector<160x16xf32>
    %70 = vector.shape_cast %69 : vector<160x16xf32> to vector<10x16x16xf32>
    %71 = tpu.transpose %70, [0, 2, 1] : vector<10x16x16xf32> -> vector<10x16x16xf32>
    %72 = arith.truncf %71 : vector<10x16x16xf32> to vector<10x16x16xbf16>
    %73 = vector.shape_cast %72 : vector<10x16x16xbf16> to vector<160x16xbf16>
    %cst_26 = arith.constant dense<0.000000e+00> : vector<160x16xf32>
    %74 = tpu.matmul %73, %68, %cst_26 {dimension_numbers = #tpu.dot_dimension_numbers<[1], [0], [0], [1], [0, 0, 1, 1], [], []>} : vector<160x16xbf16>, vector<16x16xbf16>, vector<160x16xf32> -> vector<160x16xf32>
    %75 = vector.extract_strided_slice %74 {offsets = [0, 0], sizes = [32, 16], strides = [1, 1]} : vector<160x16xf32> to vector<32x16xf32>
    %76 = vector.extract_strided_slice %74 {offsets = [32, 0], sizes = [32, 16], strides = [1, 1]} : vector<160x16xf32> to vector<32x16xf32>
    %77 = vector.extract_strided_slice %74 {offsets = [64, 0], sizes = [32, 16], strides = [1, 1]} : vector<160x16xf32> to vector<32x16xf32>
    %78 = vector.extract_strided_slice %74 {offsets = [96, 0], sizes = [32, 16], strides = [1, 1]} : vector<160x16xf32> to vector<32x16xf32>
    %79 = vector.extract_strided_slice %74 {offsets = [128, 0], sizes = [32, 16], strides = [1, 1]} : vector<160x16xf32> to vector<32x16xf32>
    %80 = arith.mulf %75, %75 : vector<32x16xf32>
    %81 = arith.mulf %76, %76 : vector<32x16xf32>
    %82 = arith.mulf %75, %76 : vector<32x16xf32>
    %83 = arith.subf %77, %80 : vector<32x16xf32>
    %84 = arith.subf %78, %81 : vector<32x16xf32>
    %85 = arith.subf %79, %82 : vector<32x16xf32>
    %cst_27 = arith.constant 2.000000e+00 : f32
    %86 = vector.broadcast %cst_27 : f32 to vector<32x16xf32>
    %87 = arith.mulf %86, %82 : vector<32x16xf32>
    %cst_28 = arith.constant 9.99999974E-5 : f32
    %88 = vector.broadcast %cst_28 : f32 to vector<32x16xf32>
    %89 = arith.addf %87, %88 : vector<32x16xf32>
    %cst_29 = arith.constant 2.000000e+00 : f32
    %90 = vector.broadcast %cst_29 : f32 to vector<32x16xf32>
    %91 = arith.mulf %90, %85 : vector<32x16xf32>
    %cst_30 = arith.constant 8.99999984E-4 : f32
    %92 = vector.broadcast %cst_30 : f32 to vector<32x16xf32>
    %93 = arith.addf %91, %92 : vector<32x16xf32>
    %94 = arith.mulf %89, %93 : vector<32x16xf32>
    %95 = arith.addf %80, %81 : vector<32x16xf32>
    %cst_31 = arith.constant 9.99999974E-5 : f32
    %96 = vector.broadcast %cst_31 : f32 to vector<32x16xf32>
    %97 = arith.addf %95, %96 : vector<32x16xf32>
    %98 = arith.addf %83, %84 : vector<32x16xf32>
    %cst_32 = arith.constant 8.99999984E-4 : f32
    %99 = vector.broadcast %cst_32 : f32 to vector<32x16xf32>
    %100 = arith.addf %98, %99 : vector<32x16xf32>
    %101 = arith.mulf %97, %100 : vector<32x16xf32>
    %102 = tpu.reciprocal %101 {approx = true} : vector<32x16xf32> -> vector<32x16xf32>
    %103 = arith.mulf %94, %102 : vector<32x16xf32>
    %104 = vector.shape_cast %103 : vector<32x16xf32> to vector<1x32x16xf32>
    %cst_33 = arith.constant dense<0.000000e+00> : vector<1xf32>
    %105 = vector.multi_reduction <add>, %104, %cst_33 [1, 2] : vector<1x32x16xf32> to vector<1xf32>
    %106 = vector.shape_cast %105 : vector<1xf32> to vector<1x1x1xf32>
    %107 = vector.extract %106[0, 0, 0] : f32 from vector<1x1x1xf32>
    %108 = tpu.iota {dimensions = array<i32: 1>} : vector<8x128xi32>
    %c0_i32 = arith.constant 0 : i32
    %109 = vector.broadcast %c0_i32 : i32 to vector<8x128xi32>
    %110 = arith.cmpi eq, %108, %109 : vector<8x128xi32>
    %cst_34 = arith.constant 0.000000e+00 : f32
    %111 = vector.broadcast %46 : f32 to vector<8x128xf32>
    %112 = vector.broadcast %cst_34 : f32 to vector<8x128xf32>
    %113 = arith.select %110, %111, %112 : vector<8x128xi1>, vector<8x128xf32>
    %c1_i32 = arith.constant 1 : i32
    %114 = vector.broadcast %c1_i32 : i32 to vector<8x128xi32>
    %115 = arith.cmpi eq, %108, %114 : vector<8x128xi32>
    %cst_35 = arith.constant 0.000000e+00 : f32
    %116 = vector.broadcast %51 : f32 to vector<8x128xf32>
    %117 = vector.broadcast %cst_35 : f32 to vector<8x128xf32>
    %118 = arith.select %115, %116, %117 : vector<8x128xi1>, vector<8x128xf32>
    %119 = arith.addf %113, %118 : vector<8x128xf32>
    %c2_i32 = arith.constant 2 : i32
    %120 = vector.broadcast %c2_i32 : i32 to vector<8x128xi32>
    %121 = arith.cmpi eq, %108, %120 : vector<8x128xi32>
    %cst_36 = arith.constant 0.000000e+00 : f32
    %122 = vector.broadcast %57 : f32 to vector<8x128xf32>
    %123 = vector.broadcast %cst_36 : f32 to vector<8x128xf32>
    %124 = arith.select %121, %122, %123 : vector<8x128xi1>, vector<8x128xf32>
    %125 = arith.addf %119, %124 : vector<8x128xf32>
    %c3_i32 = arith.constant 3 : i32
    %126 = vector.broadcast %c3_i32 : i32 to vector<8x128xi32>
    %127 = arith.cmpi eq, %108, %126 : vector<8x128xi32>
    %cst_37 = arith.constant 0.000000e+00 : f32
    %128 = vector.broadcast %107 : f32 to vector<8x128xf32>
    %129 = vector.broadcast %cst_37 : f32 to vector<8x128xf32>
    %130 = arith.select %127, %128, %129 : vector<8x128xi1>, vector<8x128xf32>
    %131 = arith.addf %125, %130 : vector<8x128xf32>
    %c0_38 = arith.constant 0 : index
    %c0_39 = arith.constant 0 : index
    %c0_40 = arith.constant 0 : index
    %132 = vector.load %arg5[%c0_38, %c0_39, %c0_40] : memref<1x8x128xf32, #tpu.memory_space<vmem>>, vector<1x8x128xf32>
    %133 = vector.shape_cast %132 : vector<1x8x128xf32> to vector<8x128xf32>
    %134 = vector.shape_cast %131 : vector<8x128xf32> to vector<1x8x128xf32>
    tpu.vector_store %arg5[%c0_38, %c0_39, %c0_40], %134 {strides = array<i32>} : memref<1x8x128xf32, #tpu.memory_space<vmem>>, vector<1x8x128xf32>,
    return
  }
  func.func @transform_0(%arg0: i32) -> (i32, i32, i32) {
    %c0_i32 = arith.constant 0 : i32
    %c0_i32_0 = arith.constant 0 : i32
    %c0_i32_1 = arith.constant 0 : i32
    return %arg0, %c0_i32, %c0_i32_0 : i32, i32, i32
  }
  func.func @transform_1(%arg0: i32) -> (i32, i32, i32) {
    %c0_i32 = arith.constant 0 : i32
    %c0_i32_0 = arith.constant 0 : i32
    %c0_i32_1 = arith.constant 0 : i32
    return %arg0, %c0_i32, %c0_i32_0 : i32, i32, i32
  }
  func.func @transform_2(%arg0: i32) -> (i32, i32) {
    %c0_i32 = arith.constant 0 : i32
    %c0_i32_0 = arith.constant 0 : i32
    %c0_i32_1 = arith.constant 0 : i32
    return %c0_i32, %c0_i32_0 : i32, i32
  }
  func.func @transform_3(%arg0: i32) -> (i32, i32) {
    %c0_i32 = arith.constant 0 : i32
    %c0_i32_0 = arith.constant 0 : i32
    %c0_i32_1 = arith.constant 0 : i32
    return %c0_i32, %c0_i32_0 : i32, i32
  }
  func.func @transform_4(%arg0: i32) -> (i32, i32, i32) {
    %c0_i32 = arith.constant 0 : i32
    %c0_i32_0 = arith.constant 0 : i32
    %c0_i32_1 = arith.constant 0 : i32
    return %arg0, %c0_i32, %c0_i32_0 : i32, i32, i32
  }
}

</mosaic_0001>

<llo_original>
// kernel: tpu_custom_call.1
$region0: #{tpu_custom_call.1}
  #allocation0 [shape = 'u32[]', space=smem, size = 0x4, offset = 0x4, fixed_abs, tag = 'smem constant byte address 0x4 - core index']
  #allocation1 [shape = 'u32[72,128]{1,0:T(1,128)}', space=vmem, size = 0x9000, scoped, tag = 'internal scratch']
  %s0 = inlined_call_operand.hbm [shape: f32[2,16,16], index: 0, kind: input, shape index: {}]
  %s1 = inlined_call_operand.hbm [shape: f32[2,16,16], index: 1, kind: input, shape index: {}]
  %s2 = inlined_call_operand.hbm [shape: bf16[16,16], index: 2, kind: input, shape index: {}]
  %s3 = inlined_call_operand.hbm [shape: bf16[16,16], index: 3, kind: input, shape index: {}]
  %s4 = inlined_call_operand.hbm [shape: f32[1,8,128], index: 4, kind: output, shape index: {}]
  %s5 = sld [smem:[#allocation0]]
  $region42: #{tpu_custom_call.1} parent=0
    _
  %s7 = ssub.s32 1, %s5
  %s8 = scalar_select 0, %s7, %s5
  $region1: #{tpu_custom_call.1} parent=0
    #allocation2 [shape = 'u8[16384]{0}', space=vmem, size = 0x4000, scoped, tag = 'input window, operand 0, single buffered']
    #allocation3 [shape = 's32[1]{0}', space=sflag, size = 0x4, scoped, tag = 'scoped memory for tpu_custom_call.1']
    #allocation4 [shape = 's32[1]{0}', space=sflag, size = 0x4, scoped, tag = 'scoped memory for tpu_custom_call.1']
    #allocation5 [shape = 'u8[16384]{0}', space=vmem, size = 0x4000, scoped, tag = 'input window, operand 1, single buffered']
    #allocation6 [shape = 's32[1]{0}', space=sflag, size = 0x4, scoped, tag = 'scoped memory for tpu_custom_call.1']
    #allocation7 [shape = 'u8[4096]{0}', space=vmem, size = 0x1000, scoped, tag = 'input window, operand 2, single buffered']
    #allocation8 [shape = 'u8[4096]{0}', space=vmem, size = 0x1000, scoped, tag = 'input window, operand 3, single buffered']
    #allocation9 [shape = 's32[1]{0}', space=sflag, size = 0x4, scoped, tag = 'scoped memory for tpu_custom_call.1']
    #allocation10 [shape = 'u8[4096]{0}', space=vmem, size = 0x1000, scoped, tag = 'output window, operand 0, single buffered']
    %9 = vsyncpa [#allocation3], 0
    %10 = vsyncpa [#allocation6], 0
    %11 = vsyncpa [#allocation9], 0
    %12 = vsyncpa [#allocation4], 0
    // Predicated region
    $region2: #{tpu_custom_call.1} parent=1 // pred_check
      _
    $region3: #{tpu_custom_call.1} parent=1 // pred_check_branch
      %14 = sbr.rel (0) target = $region5
    $region4: #{tpu_custom_call.1} parent=1 // pred_region
      %16 = vsyncadd [#allocation3], 0
      %s17 = sshll.u32 %s0, 4
      %s18 = int_to_ptr.hbm [resolvable:$true] %s17
      %s19 = sshll.u32 [#allocation2], 4
      %s20 = int_to_ptr.vmem [resolvable:$true] %s19
      %25 = dma.hbm_to_vmem [thread:$0]  %s18, 512, %s20, [#allocation3], 128, 128, 8
    $region5: #{tpu_custom_call.1} parent=1 // pred_fallthru
      _
    // Predicated region
    $region6: #{tpu_custom_call.1} parent=1 // pred_check
      _
    $region7: #{tpu_custom_call.1} parent=1 // pred_check_branch
      %27 = sbr.rel (0) target = $region9
    $region8: #{tpu_custom_call.1} parent=1 // pred_region
      %29 = vsyncadd [#allocation6], 0
      %s30 = sshll.u32 %s1, 4
      %s31 = int_to_ptr.hbm [resolvable:$true] %s30
      %s32 = sshll.u32 [#allocation5], 4
      %s33 = int_to_ptr.vmem [resolvable:$true] %s32
      %38 = dma.hbm_to_vmem [thread:$0]  %s31, 512, %s33, [#allocation6], 128, 128, 8
    $region9: #{tpu_custom_call.1} parent=1 // pred_fallthru
      _
    // Predicated region
    $region10: #{tpu_custom_call.1} parent=1 // pred_check
      _
    $region11: #{tpu_custom_call.1} parent=1 // pred_check_branch
      %40 = sbr.rel (0) target = $region13
    $region12: #{tpu_custom_call.1} parent=1 // pred_region
      %42 = vsyncadd [#allocation6], 0
      %s43 = sshll.u32 %s2, 4
      %s44 = int_to_ptr.hbm [resolvable:$true] %s43
      %s45 = sshll.u32 [#allocation7], 4
      %s46 = int_to_ptr.vmem [resolvable:$true] %s45
      %51 = dma.hbm_to_vmem [thread:$0]  %s44, 128, %s46, [#allocation6], 64, 64, 4
    $region13: #{tpu_custom_call.1} parent=1 // pred_fallthru
      _
    // Predicated region
    $region14: #{tpu_custom_call.1} parent=1 // pred_check
      _
    $region15: #{tpu_custom_call.1} parent=1 // pred_check_branch
      %53 = sbr.rel (0) target = $region17
    $region16: #{tpu_custom_call.1} parent=1 // pred_region
      %55 = vsyncadd [#allocation9], 0
      %s56 = sshll.u32 %s3, 4
      %s57 = int_to_ptr.hbm [resolvable:$true] %s56
      %s58 = sshll.u32 [#allocation8], 4
      %s59 = int_to_ptr.vmem [resolvable:$true] %s58
      %64 = dma.hbm_to_vmem [thread:$0]  %s57, 128, %s59, [#allocation9], 64, 64, 4
    $region17: #{tpu_custom_call.1} parent=1 // pred_fallthru
      _
    // Predicated region
    $region18: #{tpu_custom_call.1} parent=1 // pred_check
      _
    $region19: #{tpu_custom_call.1} parent=1 // pred_check_branch
      %66 = sbr.rel (0) target = $region21
    $region20: #{tpu_custom_call.1} parent=1 // pred_region
      %68 = dma.done [#allocation3], 512
    $region21: #{tpu_custom_call.1} parent=1 // pred_fallthru
      _
    // Predicated region
    $region22: #{tpu_custom_call.1} parent=1 // pred_check
      _
    $region23: #{tpu_custom_call.1} parent=1 // pred_check_branch
      %70 = sbr.rel (0) target = $region25
    $region24: #{tpu_custom_call.1} parent=1 // pred_region
      %72 = dma.done [#allocation6], 512
    $region25: #{tpu_custom_call.1} parent=1 // pred_fallthru
      _
    // Predicated region
    $region26: #{tpu_custom_call.1} parent=1 // pred_check
      _
    $region27: #{tpu_custom_call.1} parent=1 // pred_check_branch
      %74 = sbr.rel (0) target = $region29
    $region28: #{tpu_custom_call.1} parent=1 // pred_region
      %76 = dma.done [#allocation6], 128
    $region29: #{tpu_custom_call.1} parent=1 // pred_fallthru
      _
    // Predicated region
    $region30: #{tpu_custom_call.1} parent=1 // pred_check
      _
    $region31: #{tpu_custom_call.1} parent=1 // pred_check_branch
      %78 = sbr.rel (0) target = $region33
    $region32: #{tpu_custom_call.1} parent=1 // pred_region
      %80 = dma.done [#allocation9], 128
    $region33: #{tpu_custom_call.1} parent=1 // pred_fallthru
      _
    %v82 = vld [vmem:[#allocation2] sm:$0xff]
    %v83 = vld [vmem:[#allocation2 + $0x8] sm:$0xff]
    %v84 = vld [vmem:[#allocation2 + $0x10] sm:$0xff]
    %v85 = vld [vmem:[#allocation2 + $0x18] sm:$0xff]
    %v86 = vld [vmem:[#allocation5] sm:$0xff]
    %v87 = vld [vmem:[#allocation5 + $0x8] sm:$0xff]
    %v88 = vld [vmem:[#allocation5 + $0x10] sm:$0xff]
    %v89 = vld [vmem:[#allocation5 + $0x18] sm:$0xff]
    %v90 = vsub.f32 0.0, %v82
    %v91 = vsub.f32 0.0, %v83
    %v92 = vsub.f32 0.0, %v84
    %v93 = vsub.f32 0.0, %v85
    %v94 = vmul.f32 %v90, 1.442695
    %v95 = vpow.pop %v94
    %v96 = vmul.f32 %v91, 1.442695
    %v97 = vpow.pop %v96
    %v98 = vmul.f32 %v92, 1.442695
    %v99 = vpow.pop %v98
    %v100 = vmul.f32 %v93, 1.442695
    %v101 = vpow.pop %v100
    %v102 = vadd.f32 %v95, 1.0
    %v103 = vadd.f32 %v97, 1.0
    %v104 = vadd.f32 %v99, 1.0
    %v105 = vadd.f32 %v101, 1.0
    %v106 = vrcp.pop %v102
    %v107 = vmul.f32 %v102, %v106
    %v108 = vsub.f32 1.0, %v107
    %v109 = vmul.f32 %v106, %v108
    %v110 = vadd.f32 %v106, %v109
    %vm111 = vweird.f32 %v102
    %vm112 = vweird.f32 %v106
    %vm113 = vmor %vm111, %vm112
    %v114 = vsel %vm113, %v106, %v110
    %v115 = vand.u32 2147483647, %v102
    %vm116 = vcmp.eq.f32.partialorder %v115, 8.507059e+37
    %v117 = vand.u32 %v102, 2147483648
    %v118 = vor.u32 1.1754944e-38, %v117
    %v119 = vsel %vm116, %v118, %v114
    %v120 = vmul.f32 1.0, %v119
    %v121 = vrcp.pop %v103
    %v122 = vmul.f32 %v103, %v121
    %v123 = vsub.f32 1.0, %v122
    %v124 = vmul.f32 %v121, %v123
    %v125 = vadd.f32 %v121, %v124
    %vm126 = vweird.f32 %v103
    %vm127 = vweird.f32 %v121
    %vm128 = vmor %vm126, %vm127
    %v129 = vsel %vm128, %v121, %v125
    %v130 = vand.u32 2147483647, %v103
    %vm131 = vcmp.eq.f32.partialorder %v130, 8.507059e+37
    %v132 = vand.u32 %v103, 2147483648
    %v133 = vor.u32 1.1754944e-38, %v132
    %v134 = vsel %vm131, %v133, %v129
    %v135 = vmul.f32 1.0, %v134
    %v136 = vrcp.pop %v104
    %v137 = vmul.f32 %v104, %v136
    %v138 = vsub.f32 1.0, %v137
    %v139 = vmul.f32 %v136, %v138
    %v140 = vadd.f32 %v136, %v139
    %vm141 = vweird.f32 %v104
    %vm142 = vweird.f32 %v136
    %vm143 = vmor %vm141, %vm142
    %v144 = vsel %vm143, %v136, %v140
    %v145 = vand.u32 2147483647, %v104
    %vm146 = vcmp.eq.f32.partialorder %v145, 8.507059e+37
    %v147 = vand.u32 %v104, 2147483648
    %v148 = vor.u32 1.1754944e-38, %v147
    %v149 = vsel %vm146, %v148, %v144
    %v150 = vmul.f32 1.0, %v149
    %v151 = vrcp.pop %v105
    %v152 = vmul.f32 %v105, %v151
    %v153 = vsub.f32 1.0, %v152
    %v154 = vmul.f32 %v151, %v153
    %v155 = vadd.f32 %v151, %v154
    %vm156 = vweird.f32 %v105
    %vm157 = vweird.f32 %v151
    %vm158 = vmor %vm156, %vm157
    %v159 = vsel %vm158, %v151, %v155
    %v160 = vand.u32 2147483647, %v105
    %vm161 = vcmp.eq.f32.partialorder %v160, 8.507059e+37
    %v162 = vand.u32 %v105, 2147483648
    %v163 = vor.u32 1.1754944e-38, %v162
    %v164 = vsel %vm161, %v163, %v159
    %v165 = vmul.f32 1.0, %v164
    %v166 = vsub.f32 0.0, %v86
    %v167 = vsub.f32 0.0, %v87
    %v168 = vsub.f32 0.0, %v88
    %v169 = vsub.f32 0.0, %v89
    %v170 = vmul.f32 %v166, 1.442695
    %v171 = vpow.pop %v170
    %v172 = vmul.f32 %v167, 1.442695
    %v173 = vpow.pop %v172
    %v174 = vmul.f32 %v168, 1.442695
    %v175 = vpow.pop %v174
    %v176 = vmul.f32 %v169, 1.442695
    %v177 = vpow.pop %v176
    %v178 = vadd.f32 %v171, 1.0
    %v179 = vadd.f32 %v173, 1.0
    %v180 = vadd.f32 %v175, 1.0
    %v181 = vadd.f32 %v177, 1.0
    %v182 = vrcp.pop %v178
    %v183 = vmul.f32 %v178, %v182
    %v184 = vsub.f32 1.0, %v183
    %v185 = vmul.f32 %v182, %v184
    %v186 = vadd.f32 %v182, %v185
    %vm187 = vweird.f32 %v178
    %vm188 = vweird.f32 %v182
    %vm189 = vmor %vm187, %vm188
    %v190 = vsel %vm189, %v182, %v186
    %v191 = vand.u32 2147483647, %v178
    %vm192 = vcmp.eq.f32.partialorder %v191, 8.507059e+37
    %v193 = vand.u32 %v178, 2147483648
    %v194 = vor.u32 1.1754944e-38, %v193
    %v195 = vsel %vm192, %v194, %v190
    %v196 = vmul.f32 1.0, %v195
    %v197 = vrcp.pop %v179
    %v198 = vmul.f32 %v179, %v197
    %v199 = vsub.f32 1.0, %v198
    %v200 = vmul.f32 %v197, %v199
    %v201 = vadd.f32 %v197, %v200
    %vm202 = vweird.f32 %v179
    %vm203 = vweird.f32 %v197
    %vm204 = vmor %vm202, %vm203
    %v205 = vsel %vm204, %v197, %v201
    %v206 = vand.u32 2147483647, %v179
    %vm207 = vcmp.eq.f32.partialorder %v206, 8.507059e+37
    %v208 = vand.u32 %v179, 2147483648
    %v209 = vor.u32 1.1754944e-38, %v208
    %v210 = vsel %vm207, %v209, %v205
    %v211 = vmul.f32 1.0, %v210
    %v212 = vrcp.pop %v180
    %v213 = vmul.f32 %v180, %v212
    %v214 = vsub.f32 1.0, %v213
    %v215 = vmul.f32 %v212, %v214
    %v216 = vadd.f32 %v212, %v215
    %vm217 = vweird.f32 %v180
    %vm218 = vweird.f32 %v212
    %vm219 = vmor %vm217, %vm218
    %v220 = vsel %vm219, %v212, %v216
    %v221 = vand.u32 2147483647, %v180
    %vm222 = vcmp.eq.f32.partialorder %v221, 8.507059e+37
    %v223 = vand.u32 %v180, 2147483648
    %v224 = vor.u32 1.1754944e-38, %v223
    %v225 = vsel %vm222, %v224, %v220
    %v226 = vmul.f32 1.0, %v225
    %v227 = vrcp.pop %v181
    %v228 = vmul.f32 %v181, %v227
    %v229 = vsub.f32 1.0, %v228
    %v230 = vmul.f32 %v227, %v229
    %v231 = vadd.f32 %v227, %v230
    %vm232 = vweird.f32 %v181
    %vm233 = vweird.f32 %v227
    %vm234 = vmor %vm232, %vm233
    %v235 = vsel %vm234, %v227, %v231
    %v236 = vand.u32 2147483647, %v181
    %vm237 = vcmp.eq.f32.partialorder %v236, 8.507059e+37
    %v238 = vand.u32 %v181, 2147483648
    %v239 = vor.u32 1.1754944e-38, %v238
    %v240 = vsel %vm237, %v239, %v235
    %v241 = vmul.f32 1.0, %v240
    %vm242 = vcmp.gt.f32.partialorder %v196, 0.0
    %vm243 = vcmp.gt.f32.partialorder %v211, 0.0
    %vm244 = vcmp.gt.f32.partialorder %v226, 0.0
    %vm245 = vcmp.gt.f32.partialorder %v241, 0.0
    %v246 = vmin.f32 %v86, 0.0
    %v247 = vmin.f32 %v87, 0.0
    %v248 = vmin.f32 %v88, 0.0
    %v249 = vmin.f32 %v89, 0.0
    %v250 = vand.u32 2147483647, %v86
    %v251 = vand.u32 2147483647, %v87
    %v252 = vand.u32 2147483647, %v88
    %v253 = vand.u32 2147483647, %v89
    %v254 = vsub.f32 0.0, %v250
    %v255 = vsub.f32 0.0, %v251
    %v256 = vsub.f32 0.0, %v252
    %v257 = vsub.f32 0.0, %v253
    %v258 = vmul.f32 %v254, 1.442695
    %v259 = vpow.pop %v258
    %v260 = vmul.f32 %v255, 1.442695
    %v261 = vpow.pop %v260
    %v262 = vmul.f32 %v256, 1.442695
    %v263 = vpow.pop %v262
    %v264 = vmul.f32 %v257, 1.442695
    %v265 = vpow.pop %v264
    %v266 = vadd.f32 %v259, 1.0
    %v267 = vadd.f32 %v261, 1.0
    %v268 = vadd.f32 %v263, 1.0
    %v269 = vadd.f32 %v265, 1.0
    %v270 = vlog2.pop %v266
    %v271 = vmul.f32 %v270, 0.6931472
    %v272 = vlog2.pop %v267
    %v273 = vmul.f32 %v272, 0.6931472
    %v274 = vlog2.pop %v268
    %v275 = vmul.f32 %v274, 0.6931472
    %v276 = vlog2.pop %v269
    %v277 = vmul.f32 %v276, 0.6931472
    %v278 = vsub.f32 %v246, %v271
    %v279 = vsub.f32 %v247, %v273
    %v280 = vsub.f32 %v248, %v275
    %v281 = vsub.f32 %v249, %v277
    %v282 = vmin.f32 %v82, 0.0
    %v283 = vmin.f32 %v83, 0.0
    %v284 = vmin.f32 %v84, 0.0
    %v285 = vmin.f32 %v85, 0.0
    %v286 = vand.u32 2147483647, %v82
    %v287 = vand.u32 2147483647, %v83
    %v288 = vand.u32 2147483647, %v84
    %v289 = vand.u32 2147483647, %v85
    %v290 = vsub.f32 0.0, %v286
    %v291 = vsub.f32 0.0, %v287
    %v292 = vsub.f32 0.0, %v288
    %v293 = vsub.f32 0.0, %v289
    %v294 = vmul.f32 %v290, 1.442695
    %v295 = vpow.pop %v294
    %v296 = vmul.f32 %v291, 1.442695
    %v297 = vpow.pop %v296
    %v298 = vmul.f32 %v292, 1.442695
    %v299 = vpow.pop %v298
    %v300 = vmul.f32 %v293, 1.442695
    %v301 = vpow.pop %v300
    %v302 = vadd.f32 %v295, 1.0
    %v303 = vadd.f32 %v297, 1.0
    %v304 = vadd.f32 %v299, 1.0
    %v305 = vadd.f32 %v301, 1.0
    %v306 = vlog2.pop %v302
    %v307 = vmul.f32 %v306, 0.6931472
    %v308 = vlog2.pop %v303
    %v309 = vmul.f32 %v308, 0.6931472
    %v310 = vlog2.pop %v304
    %v311 = vmul.f32 %v310, 0.6931472
    %v312 = vlog2.pop %v305
    %v313 = vmul.f32 %v312, 0.6931472
    %v314 = vsub.f32 %v282, %v307
    %v315 = vsub.f32 %v283, %v309
    %v316 = vsub.f32 %v284, %v311
    %v317 = vsub.f32 %v285, %v313
    %v318 = vsub.f32 %v278, %v314
    %v319 = vsub.f32 %v279, %v315
    %v320 = vsub.f32 %v280, %v316
    %v321 = vsub.f32 %v281, %v317
    %v322 = vsel %vm242, %v318, 0.0
    %v323 = vsel %vm243, %v319, 0.0
    %v324 = vsel %vm244, %v320, 0.0
    %v325 = vsel %vm245, %v321, 0.0
    %vm326 = vcmask 130048
    %v327 = vsel %vm326, %v322, 0.0
    %v328 = vsel %vm326, %v323, 0.0
    %v329 = vadd.f32 %v327, %v328
    %v330 = vsel %vm326, %v324, 0.0
    %v331 = vadd.f32 %v329, %v330
    %v332 = vsel %vm326, %v325, 0.0
    %v333 = vadd.f32 %v331, %v332
    %334 = vadd.xlane.f32.xlu0 %v333
    %v335 = vpop.xlane.xlu0 %334
    %v336 = vrot.slane %v335, 4
    %v337 = vadd.f32 %v335, %v336
    %v338 = vrot.slane %v337, 2
    %v339 = vadd.f32 %v337, %v338
    %v340 = vrot.slane %v339, 1
    %v341 = vadd.f32 %v339, %v340
    %s342 = vtos %v341
    %v343 = vmul.f32 %v322, %v322
    %v344 = vmul.f32 %v323, %v323
    %v345 = vmul.f32 %v324, %v324
    %v346 = vmul.f32 %v325, %v325
    %v347 = vsel %vm326, %v343, 0.0
    %v348 = vsel %vm326, %v344, 0.0
    %v349 = vadd.f32 %v347, %v348
    %v350 = vsel %vm326, %v345, 0.0
    %v351 = vadd.f32 %v349, %v350
    %v352 = vsel %vm326, %v346, 0.0
    %v353 = vadd.f32 %v351, %v352
    %354 = vadd.xlane.f32.xlu0 %v353
    %v355 = vpop.xlane.xlu0 %354
    %v356 = vrot.slane %v355, 4
    %v357 = vadd.f32 %v355, %v356
    %v358 = vrot.slane %v357, 2
    %v359 = vadd.f32 %v357, %v358
    %v360 = vrot.slane %v359, 1
    %v361 = vadd.f32 %v359, %v360
    %s362 = vtos %v361
    %v363 = vsel %vm242, 1, 0
    %v364 = vsel %vm243, 1, 0
    %v365 = vsel %vm244, 1, 0
    %v366 = vsel %vm245, 1, 0
    %v367 = vcvt.s32.f32 %v363
    %v368 = vcvt.s32.f32 %v364
    %v369 = vcvt.s32.f32 %v365
    %v370 = vcvt.s32.f32 %v366
    %v371 = vsel %vm326, %v367, 0.0
    %v372 = vsel %vm326, %v368, 0.0
    %v373 = vadd.f32 %v371, %v372
    %v374 = vsel %vm326, %v369, 0.0
    %v375 = vadd.f32 %v373, %v374
    %v376 = vsel %vm326, %v370, 0.0
    %v377 = vadd.f32 %v375, %v376
    %378 = vadd.xlane.f32.xlu0 %v377
    %v379 = vpop.xlane.xlu0 %378
    %v380 = vrot.slane %v379, 4
    %v381 = vadd.f32 %v379, %v380
    %v382 = vrot.slane %v381, 2
    %v383 = vadd.f32 %v381, %v382
    %v384 = vrot.slane %v383, 1
    %v385 = vadd.f32 %v383, %v384
    %s386 = vtos %v385
    %v387 = vpack.c.bf16 %v120, %v120
    %v388 = vpack.c.bf16 %v135, %v135
    %v389 = vpack.c.bf16 %v150, %v150
    %v390 = vpack.c.bf16 %v165, %v165
    %v391 = vpack.c.bf16 %v196, %v196
    %v392 = vpack.c.bf16 %v211, %v211
    %v393 = vpack.c.bf16 %v226, %v226
    %v394 = vpack.c.bf16 %v241, %v241
    %v395 = vmul.f32 %v120, %v120
    %v396 = vmul.f32 %v135, %v135
    %v397 = vmul.f32 %v150, %v150
    %v398 = vmul.f32 %v165, %v165
    %v399 = vpack.c.bf16 %v395, %v395
    %v400 = vpack.c.bf16 %v396, %v396
    %v401 = vpack.c.bf16 %v397, %v397
    %v402 = vpack.c.bf16 %v398, %v398
    %v403 = vmul.f32 %v196, %v196
    %v404 = vmul.f32 %v211, %v211
    %v405 = vmul.f32 %v226, %v226
    %v406 = vmul.f32 %v241, %v241
    %v407 = vpack.c.bf16 %v403, %v403
    %v408 = vpack.c.bf16 %v404, %v404
    %v409 = vpack.c.bf16 %v405, %v405
    %v410 = vpack.c.bf16 %v406, %v406
    %v411 = vmul.f32 %v120, %v196
    %v412 = vmul.f32 %v135, %v211
    %v413 = vmul.f32 %v150, %v226
    %v414 = vmul.f32 %v165, %v241
    %v415 = vpack.c.bf16 %v411, %v411
    %v416 = vpack.c.bf16 %v412, %v412
    %v417 = vpack.c.bf16 %v413, %v413
    %v418 = vpack.c.bf16 %v414, %v414
    %v423 = vunpack.c.l.b16 %v387
    %v424 = vunpack.c.l.b16 %v388
    %v425 = vunpack.c.l.b16 %v389
    %v426 = vunpack.c.l.b16 %v390
    %v427 = vpack.c.b16 %v424, %v423
    %v428 = vpack.c.b16 %v426, %v425
    %v433 = vunpack.c.l.b16 %v391
    %v434 = vunpack.c.l.b16 %v392
    %v435 = vunpack.c.l.b16 %v393
    %v436 = vunpack.c.l.b16 %v394
    %v437 = vpack.c.b16 %v434, %v433
    %v438 = vpack.c.b16 %v436, %v435
    %v443 = vunpack.c.l.b16 %v399
    %v444 = vunpack.c.l.b16 %v400
    %v445 = vunpack.c.l.b16 %v401
    %v446 = vunpack.c.l.b16 %v402
    %v447 = vpack.c.b16 %v444, %v443
    %v448 = vpack.c.b16 %v446, %v445
    %v453 = vunpack.c.l.b16 %v407
    %v454 = vunpack.c.l.b16 %v408
    %v455 = vunpack.c.l.b16 %v409
    %v456 = vunpack.c.l.b16 %v410
    %v457 = vpack.c.b16 %v454, %v453
    %v458 = vpack.c.b16 %v456, %v455
    %v463 = vunpack.c.l.b16 %v415
    %v464 = vunpack.c.l.b16 %v416
    %v465 = vunpack.c.l.b16 %v417
    %v466 = vunpack.c.l.b16 %v418
    %v467 = vpack.c.b16 %v464, %v463
    %v468 = vpack.c.b16 %v466, %v465
    %v469 = vld [vmem:[#allocation8] sm:$0xf]
    %v470 = vld [vmem:[#allocation8 + $0x4] sm:$0xf]
    %v471 = vld [vmem:[#allocation7] sm:$0xf]
    %v472 = vld [vmem:[#allocation7 + $0x4] sm:$0xf]
    %v475 = vunpack.c.l.b16 %v469
    %v476 = vunpack.c.l.b16 %v470
    %v477 = vpack.c.b16 %v476, %v475
    %v480 = vsel %vm326, %v427, 0
    %v483 = vsel %vm326, %v428, 0
    %v486 = vsel %vm326, %v437, 0
    %v489 = vsel %vm326, %v438, 0
    %v492 = vsel %vm326, %v447, 0
    %v495 = vsel %vm326, %v448, 0
    %v498 = vsel %vm326, %v457, 0
    %v501 = vsel %vm326, %v458, 0
    %v504 = vsel %vm326, %v467, 0
    %v507 = vsel %vm326, %v468, 0
    %509 = vmatpush.bf16.msra.mxu0 0
    %510 = vmatpush.bf16.msra.mxu0 0
    %511 = vmatpush.bf16.msra.mxu0 0
    %512 = vmatpush.bf16.msra.mxu0 0
    %513 = vmatpush.bf16.msra.mxu0 0
    %514 = vmatpush.bf16.msra.mxu0 0
    %515 = vmatpush.bf16.msra.mxu0 0
    %516 = vmatpush.bf16.msra.mxu0 %v477
    %517 = vmatmul.bf16.gmra.mxu0 %v480
    %v518 = vpop.f32.mrf.mxu0
    %v519 = vadd.f32 0.0, %v518
    %v520 = vpop.f32.mrf.mxu0
    %v521 = vadd.f32 0.0, %v520
    %522 = vmatmul.bf16.gmra.mxu0 %v483
    %v523 = vpop.f32.mrf.mxu0
    %v524 = vadd.f32 0.0, %v523
    %v525 = vpop.f32.mrf.mxu0
    %v526 = vadd.f32 0.0, %v525
    %527 = vmatmul.bf16.gmra.mxu0 %v486
    %v528 = vpop.f32.mrf.mxu0
    %v529 = vadd.f32 0.0, %v528
    %v530 = vpop.f32.mrf.mxu0
    %v531 = vadd.f32 0.0, %v530
    %532 = vmatmul.bf16.gmra.mxu0 %v489
    %v533 = vpop.f32.mrf.mxu0
    %v534 = vadd.f32 0.0, %v533
    %v535 = vpop.f32.mrf.mxu0
    %v536 = vadd.f32 0.0, %v535
    %537 = vmatmul.bf16.gmra.mxu0 %v492
    %v538 = vpop.f32.mrf.mxu0
    %v539 = vadd.f32 0.0, %v538
    %v540 = vpop.f32.mrf.mxu0
    %v541 = vadd.f32 0.0, %v540
    %542 = vmatmul.bf16.gmra.mxu0 %v495
    %v543 = vpop.f32.mrf.mxu0
    %v544 = vadd.f32 0.0, %v543
    %v545 = vpop.f32.mrf.mxu0
    %v546 = vadd.f32 0.0, %v545
    %547 = vmatmul.bf16.gmra.mxu0 %v498
    %v548 = vpop.f32.mrf.mxu0
    %v549 = vadd.f32 0.0, %v548
    %v550 = vpop.f32.mrf.mxu0
    %v551 = vadd.f32 0.0, %v550
    %552 = vmatmul.bf16.gmra.mxu0 %v501
    %v553 = vpop.f32.mrf.mxu0
    %v554 = vadd.f32 0.0, %v553
    %v555 = vpop.f32.mrf.mxu0
    %v556 = vadd.f32 0.0, %v555
    %557 = vmatmul.bf16.gmra.mxu0 %v504
    %v558 = vpop.f32.mrf.mxu0
    %v559 = vadd.f32 0.0, %v558
    %v560 = vpop.f32.mrf.mxu0
    %v561 = vadd.f32 0.0, %v560
    %562 = vmatmul.bf16.gmra.mxu0 %v507
    %v563 = vpop.f32.mrf.mxu0
    %v564 = vadd.f32 0.0, %v563
    %v565 = vpop.f32.mrf.mxu0
    %v566 = vadd.f32 0.0, %v565
    %567 = vdwg.mxu0
    %568 = vxpose.xlu0.b32.start [1/16] %v519, 128
    %569 = vxpose.xlu0.b32.cont [2/16] %v521, 128
    %570 = vxpose.xlu0.b32.cont [3/16] 0.0, 128
    %571 = vxpose.xlu0.b32.cont [4/16] 0.0, 128
    %572 = vxpose.xlu0.b32.cont [5/16] 0.0, 128
    %573 = vxpose.xlu0.b32.cont [6/16] 0.0, 128
    %574 = vxpose.xlu0.b32.cont [7/16] 0.0, 128
    %575 = vxpose.xlu0.b32.cont [8/16] 0.0, 128
    %576 = vxpose.xlu0.b32.cont [9/16] 0.0, 128
    %577 = vxpose.xlu0.b32.cont [10/16] 0.0, 128
    %578 = vxpose.xlu0.b32.cont [11/16] 0.0, 128
    %579 = vxpose.xlu0.b32.cont [12/16] 0.0, 128
    %580 = vxpose.xlu0.b32.cont [13/16] 0.0, 128
    %581 = vxpose.xlu0.b32.cont [14/16] 0.0, 128
    %582 = vxpose.xlu0.b32.cont [15/16] 0.0, 128
    %583 = vxpose.xlu0.b32.end [16/16] 0.0, 128
    %v584 = vpop.trf.xlu0
    %v585 = vpop.trf.xlu0
    %v586 = vpop.trf.xlu0
    %v587 = vpop.trf.xlu0
    %v588 = vpop.trf.xlu0
    %v589 = vpop.trf.xlu0
    %v590 = vpop.trf.xlu0
    %v591 = vpop.trf.xlu0
    %v592 = vpop.trf.xlu0
    %v593 = vpop.trf.xlu0
    %v594 = vpop.trf.xlu0
    %v595 = vpop.trf.xlu0
    %v596 = vpop.trf.xlu0
    %v597 = vpop.trf.xlu0
    %v598 = vpop.trf.xlu0
    %v599 = vpop.trf.xlu0
    %600 = vxpose.xlu0.b32.start [1/16] %v524, 128
    %601 = vxpose.xlu0.b32.cont [2/16] %v526, 128
    %602 = vxpose.xlu0.b32.cont [3/16] 0.0, 128
    %603 = vxpose.xlu0.b32.cont [4/16] 0.0, 128
    %604 = vxpose.xlu0.b32.cont [5/16] 0.0, 128
    %605 = vxpose.xlu0.b32.cont [6/16] 0.0, 128
    %606 = vxpose.xlu0.b32.cont [7/16] 0.0, 128
    %607 = vxpose.xlu0.b32.cont [8/16] 0.0, 128
    %608 = vxpose.xlu0.b32.cont [9/16] 0.0, 128
    %609 = vxpose.xlu0.b32.cont [10/16] 0.0, 128
    %610 = vxpose.xlu0.b32.cont [11/16] 0.0, 128
    %611 = vxpose.xlu0.b32.cont [12/16] 0.0, 128
    %612 = vxpose.xlu0.b32.cont [13/16] 0.0, 128
    %613 = vxpose.xlu0.b32.cont [14/16] 0.0, 128
    %614 = vxpose.xlu0.b32.cont [15/16] 0.0, 128
    %615 = vxpose.xlu0.b32.end [16/16] 0.0, 128
    %v616 = vpop.trf.xlu0
    %v617 = vpop.trf.xlu0
    %v618 = vpop.trf.xlu0
    %v619 = vpop.trf.xlu0
    %v620 = vpop.trf.xlu0
    %v621 = vpop.trf.xlu0
    %v622 = vpop.trf.xlu0
    %v623 = vpop.trf.xlu0
    %v624 = vpop.trf.xlu0
    %v625 = vpop.trf.xlu0
    %v626 = vpop.trf.xlu0
    %v627 = vpop.trf.xlu0
    %v628 = vpop.trf.xlu0
    %v629 = vpop.trf.xlu0
    %v630 = vpop.trf.xlu0
    %v631 = vpop.trf.xlu0
    %632 = vxpose.xlu0.b32.start [1/16] %v529, 128
    %633 = vxpose.xlu0.b32.cont [2/16] %v531, 128
    %634 = vxpose.xlu0.b32.cont [3/16] 0.0, 128
    %635 = vxpose.xlu0.b32.cont [4/16] 0.0, 128
    %636 = vxpose.xlu0.b32.cont [5/16] 0.0, 128
    %637 = vxpose.xlu0.b32.cont [6/16] 0.0, 128
    %638 = vxpose.xlu0.b32.cont [7/16] 0.0, 128
    %639 = vxpose.xlu0.b32.cont [8/16] 0.0, 128
    %640 = vxpose.xlu0.b32.cont [9/16] 0.0, 128
    %641 = vxpose.xlu0.b32.cont [10/16] 0.0, 128
    %642 = vxpose.xlu0.b32.cont [11/16] 0.0, 128
    %643 = vxpose.xlu0.b32.cont [12/16] 0.0, 128
    %644 = vxpose.xlu0.b32.cont [13/16] 0.0, 128
    %645 = vxpose.xlu0.b32.cont [14/16] 0.0, 128
    %646 = vxpose.xlu0.b32.cont [15/16] 0.0, 128
    %647 = vxpose.xlu0.b32.end [16/16] 0.0, 128
    %v648 = vpop.trf.xlu0
    %v649 = vpop.trf.xlu0
    %v650 = vpop.trf.xlu0
    %v651 = vpop.trf.xlu0
    %v652 = vpop.trf.xlu0
    %v653 = vpop.trf.xlu0
    %v654 = vpop.trf.xlu0
    %v655 = vpop.trf.xlu0
    %v656 = vpop.trf.xlu0
    %v657 = vpop.trf.xlu0
    %v658 = vpop.trf.xlu0
    %v659 = vpop.trf.xlu0
    %v660 = vpop.trf.xlu0
    %v661 = vpop.trf.xlu0
    %v662 = vpop.trf.xlu0
    %v663 = vpop.trf.xlu0
    %664 = vxpose.xlu0.b32.start [1/16] %v534, 128
    %665 = vxpose.xlu0.b32.cont [2/16] %v536, 128
    %666 = vxpose.xlu0.b32.cont [3/16] 0.0, 128
    %667 = vxpose.xlu0.b32.cont [4/16] 0.0, 128
    %668 = vxpose.xlu0.b32.cont [5/16] 0.0, 128
    %669 = vxpose.xlu0.b32.cont [6/16] 0.0, 128
    %670 = vxpose.xlu0.b32.cont [7/16] 0.0, 128
    %671 = vxpose.xlu0.b32.cont [8/16] 0.0, 128
    %672 = vxpose.xlu0.b32.cont [9/16] 0.0, 128
    %673 = vxpose.xlu0.b32.cont [10/16] 0.0, 128
    %674 = vxpose.xlu0.b32.cont [11/16] 0.0, 128
    %675 = vxpose.xlu0.b32.cont [12/16] 0.0, 128
    %676 = vxpose.xlu0.b32.cont [13/16] 0.0, 128
    %677 = vxpose.xlu0.b32.cont [14/16] 0.0, 128
    %678 = vxpose.xlu0.b32.cont [15/16] 0.0, 128
    %679 = vxpose.xlu0.b32.end [16/16] 0.0, 128
    %v680 = vpop.trf.xlu0
    %v681 = vpop.trf.xlu0
    %v682 = vpop.trf.xlu0
    %v683 = vpop.trf.xlu0
    %v684 = vpop.trf.xlu0
    %v685 = vpop.trf.xlu0
    %v686 = vpop.trf.xlu0
    %v687 = vpop.trf.xlu0
    %v688 = vpop.trf.xlu0
    %v689 = vpop.trf.xlu0
    %v690 = vpop.trf.xlu0
    %v691 = vpop.trf.xlu0
    %v692 = vpop.trf.xlu0
    %v693 = vpop.trf.xlu0
    %v694 = vpop.trf.xlu0
    %v695 = vpop.trf.xlu0
    %696 = vxpose.xlu0.b32.start [1/16] %v539, 128
    %697 = vxpose.xlu0.b32.cont [2/16] %v541, 128
    %698 = vxpose.xlu0.b32.cont [3/16] 0.0, 128
    %699 = vxpose.xlu0.b32.cont [4/16] 0.0, 128
    %700 = vxpose.xlu0.b32.cont [5/16] 0.0, 128
    %701 = vxpose.xlu0.b32.cont [6/16] 0.0, 128
    %702 = vxpose.xlu0.b32.cont [7/16] 0.0, 128
    %703 = vxpose.xlu0.b32.cont [8/16] 0.0, 128
    %704 = vxpose.xlu0.b32.cont [9/16] 0.0, 128
    %705 = vxpose.xlu0.b32.cont [10/16] 0.0, 128
    %706 = vxpose.xlu0.b32.cont [11/16] 0.0, 128
    %707 = vxpose.xlu0.b32.cont [12/16] 0.0, 128
    %708 = vxpose.xlu0.b32.cont [13/16] 0.0, 128
    %709 = vxpose.xlu0.b32.cont [14/16] 0.0, 128
    %710 = vxpose.xlu0.b32.cont [15/16] 0.0, 128
    %711 = vxpose.xlu0.b32.end [16/16] 0.0, 128
    %v712 = vpop.trf.xlu0
    %v713 = vpop.trf.xlu0
    %v714 = vpop.trf.xlu0
    %v715 = vpop.trf.xlu0
    %v716 = vpop.trf.xlu0
    %v717 = vpop.trf.xlu0
    %v718 = vpop.trf.xlu0
    %v719 = vpop.trf.xlu0
    %v720 = vpop.trf.xlu0
    %v721 = vpop.trf.xlu0
    %v722 = vpop.trf.xlu0
    %v723 = vpop.trf.xlu0
    %v724 = vpop.trf.xlu0
    %v725 = vpop.trf.xlu0
    %v726 = vpop.trf.xlu0
    %v727 = vpop.trf.xlu0
    %728 = vxpose.xlu0.b32.start [1/16] %v544, 128
    %729 = vxpose.xlu0.b32.cont [2/16] %v546, 128
    %730 = vxpose.xlu0.b32.cont [3/16] 0.0, 128
    %731 = vxpose.xlu0.b32.cont [4/16] 0.0, 128
    %732 = vxpose.xlu0.b32.cont [5/16] 0.0, 128
    %733 = vxpose.xlu0.b32.cont [6/16] 0.0, 128
    %734 = vxpose.xlu0.b32.cont [7/16] 0.0, 128
    %735 = vxpose.xlu0.b32.cont [8/16] 0.0, 128
    %736 = vxpose.xlu0.b32.cont [9/16] 0.0, 128
    %737 = vxpose.xlu0.b32.cont [10/16] 0.0, 128
    %738 = vxpose.xlu0.b32.cont [11/16] 0.0, 128
    %739 = vxpose.xlu0.b32.cont [12/16] 0.0, 128
    %740 = vxpose.xlu0.b32.cont [13/16] 0.0, 128
    %741 = vxpose.xlu0.b32.cont [14/16] 0.0, 128
    %742 = vxpose.xlu0.b32.cont [15/16] 0.0, 128
    %743 = vxpose.xlu0.b32.end [16/16] 0.0, 128
    %v744 = vpop.trf.xlu0
    %v745 = vpop.trf.xlu0
    %v746 = vpop.trf.xlu0
    %v747 = vpop.trf.xlu0
    %v748 = vpop.trf.xlu0
    %v749 = vpop.trf.xlu0
    %v750 = vpop.trf.xlu0
    %v751 = vpop.trf.xlu0
    %v752 = vpop.trf.xlu0
    %v753 = vpop.trf.xlu0
    %v754 = vpop.trf.xlu0
    %v755 = vpop.trf.xlu0
    %v756 = vpop.trf.xlu0
    %v757 = vpop.trf.xlu0
    %v758 = vpop.trf.xlu0
    %v759 = vpop.trf.xlu0
    %760 = vxpose.xlu0.b32.start [1/16] %v549, 128
    %761 = vxpose.xlu0.b32.cont [2/16] %v551, 128
    %762 = vxpose.xlu0.b32.cont [3/16] 0.0, 128
    %763 = vxpose.xlu0.b32.cont [4/16] 0.0, 128
    %764 = vxpose.xlu0.b32.cont [5/16] 0.0, 128
    %765 = vxpose.xlu0.b32.cont [6/16] 0.0, 128
    %766 = vxpose.xlu0.b32.cont [7/16] 0.0, 128
    %767 = vxpose.xlu0.b32.cont [8/16] 0.0, 128
    %768 = vxpose.xlu0.b32.cont [9/16] 0.0, 128
    %769 = vxpose.xlu0.b32.cont [10/16] 0.0, 128
    %770 = vxpose.xlu0.b32.cont [11/16] 0.0, 128
    %771 = vxpose.xlu0.b32.cont [12/16] 0.0, 128
    %772 = vxpose.xlu0.b32.cont [13/16] 0.0, 128
    %773 = vxpose.xlu0.b32.cont [14/16] 0.0, 128
    %774 = vxpose.xlu0.b32.cont [15/16] 0.0, 128
    %775 = vxpose.xlu0.b32.end [16/16] 0.0, 128
    %v776 = vpop.trf.xlu0
    %v777 = vpop.trf.xlu0
    %v778 = vpop.trf.xlu0
    %v779 = vpop.trf.xlu0
    %v780 = vpop.trf.xlu0
    %v781 = vpop.trf.xlu0
    %v782 = vpop.trf.xlu0
    %v783 = vpop.trf.xlu0
    %v784 = vpop.trf.xlu0
    %v785 = vpop.trf.xlu0
    %v786 = vpop.trf.xlu0
    %v787 = vpop.trf.xlu0
    %v788 = vpop.trf.xlu0
    %v789 = vpop.trf.xlu0
    %v790 = vpop.trf.xlu0
    %v791 = vpop.trf.xlu0
    %792 = vxpose.xlu0.b32.start [1/16] %v554, 128
    %793 = vxpose.xlu0.b32.cont [2/16] %v556, 128
    %794 = vxpose.xlu0.b32.cont [3/16] 0.0, 128
    %795 = vxpose.xlu0.b32.cont [4/16] 0.0, 128
    %796 = vxpose.xlu0.b32.cont [5/16] 0.0, 128
    %797 = vxpose.xlu0.b32.cont [6/16] 0.0, 128
    %798 = vxpose.xlu0.b32.cont [7/16] 0.0, 128
    %799 = vxpose.xlu0.b32.cont [8/16] 0.0, 128
    %800 = vxpose.xlu0.b32.cont [9/16] 0.0, 128
    %801 = vxpose.xlu0.b32.cont [10/16] 0.0, 128
    %802 = vxpose.xlu0.b32.cont [11/16] 0.0, 128
    %803 = vxpose.xlu0.b32.cont [12/16] 0.0, 128
    %804 = vxpose.xlu0.b32.cont [13/16] 0.0, 128
    %805 = vxpose.xlu0.b32.cont [14/16] 0.0, 128
    %806 = vxpose.xlu0.b32.cont [15/16] 0.0, 128
    %807 = vxpose.xlu0.b32.end [16/16] 0.0, 128
    %v808 = vpop.trf.xlu0
    %v809 = vpop.trf.xlu0
    %v810 = vpop.trf.xlu0
    %v811 = vpop.trf.xlu0
    %v812 = vpop.trf.xlu0
    %v813 = vpop.trf.xlu0
    %v814 = vpop.trf.xlu0
    %v815 = vpop.trf.xlu0
    %v816 = vpop.trf.xlu0
    %v817 = vpop.trf.xlu0
    %v818 = vpop.trf.xlu0
    %v819 = vpop.trf.xlu0
    %v820 = vpop.trf.xlu0
    %v821 = vpop.trf.xlu0
    %v822 = vpop.trf.xlu0
    %v823 = vpop.trf.xlu0
    %824 = vxpose.xlu0.b32.start [1/16] %v559, 128
    %825 = vxpose.xlu0.b32.cont [2/16] %v561, 128
    %826 = vxpose.xlu0.b32.cont [3/16] 0.0, 128
    %827 = vxpose.xlu0.b32.cont [4/16] 0.0, 128
    %828 = vxpose.xlu0.b32.cont [5/16] 0.0, 128
    %829 = vxpose.xlu0.b32.cont [6/16] 0.0, 128
    %830 = vxpose.xlu0.b32.cont [7/16] 0.0, 128
    %831 = vxpose.xlu0.b32.cont [8/16] 0.0, 128
    %832 = vxpose.xlu0.b32.cont [9/16] 0.0, 128
    %833 = vxpose.xlu0.b32.cont [10/16] 0.0, 128
    %834 = vxpose.xlu0.b32.cont [11/16] 0.0, 128
    %835 = vxpose.xlu0.b32.cont [12/16] 0.0, 128
    %836 = vxpose.xlu0.b32.cont [13/16] 0.0, 128
    %837 = vxpose.xlu0.b32.cont [14/16] 0.0, 128
    %838 = vxpose.xlu0.b32.cont [15/16] 0.0, 128
    %839 = vxpose.xlu0.b32.end [16/16] 0.0, 128
    %v840 = vpop.trf.xlu0
    %v841 = vpop.trf.xlu0
    %v842 = vpop.trf.xlu0
    %v843 = vpop.trf.xlu0
    %v844 = vpop.trf.xlu0
    %v845 = vpop.trf.xlu0
    %v846 = vpop.trf.xlu0
    %v847 = vpop.trf.xlu0
    %v848 = vpop.trf.xlu0
    %v849 = vpop.trf.xlu0
    %v850 = vpop.trf.xlu0
    %v851 = vpop.trf.xlu0
    %v852 = vpop.trf.xlu0
    %v853 = vpop.trf.xlu0
    %v854 = vpop.trf.xlu0
    %v855 = vpop.trf.xlu0
    %856 = vxpose.xlu0.b32.start [1/16] %v564, 128
    %857 = vxpose.xlu0.b32.cont [2/16] %v566, 128
    %858 = vxpose.xlu0.b32.cont [3/16] 0.0, 128
    %859 = vxpose.xlu0.b32.cont [4/16] 0.0, 128
    %860 = vxpose.xlu0.b32.cont [5/16] 0.0, 128
    %861 = vxpose.xlu0.b32.cont [6/16] 0.0, 128
    %862 = vxpose.xlu0.b32.cont [7/16] 0.0, 128
    %863 = vxpose.xlu0.b32.cont [8/16] 0.0, 128
    %864 = vxpose.xlu0.b32.cont [9/16] 0.0, 128
    %865 = vxpose.xlu0.b32.cont [10/16] 0.0, 128
    %866 = vxpose.xlu0.b32.cont [11/16] 0.0, 128
    %867 = vxpose.xlu0.b32.cont [12/16] 0.0, 128
    %868 = vxpose.xlu0.b32.cont [13/16] 0.0, 128
    %869 = vxpose.xlu0.b32.cont [14/16] 0.0, 128
    %870 = vxpose.xlu0.b32.cont [15/16] 0.0, 128
    %871 = vxpose.xlu0.b32.end [16/16] 0.0, 128
    %v872 = vpop.trf.xlu0
    %v873 = vpop.trf.xlu0
    %v874 = vpop.trf.xlu0
    %v875 = vpop.trf.xlu0
    %v876 = vpop.trf.xlu0
    %v877 = vpop.trf.xlu0
    %v878 = vpop.trf.xlu0
    %v879 = vpop.trf.xlu0
    %v880 = vpop.trf.xlu0
    %v881 = vpop.trf.xlu0
    %v882 = vpop.trf.xlu0
    %v883 = vpop.trf.xlu0
    %v884 = vpop.trf.xlu0
    %v885 = vpop.trf.xlu0
    %v886 = vpop.trf.xlu0
    %v887 = vpop.trf.xlu0
    %v888 = vpack.c.bf16 %v584, %v584
    %v889 = vpack.c.bf16 %v585, %v585
    %v890 = vpack.c.bf16 %v616, %v616
    %v891 = vpack.c.bf16 %v617, %v617
    %v892 = vpack.c.bf16 %v648, %v648
    %v893 = vpack.c.bf16 %v649, %v649
    %v894 = vpack.c.bf16 %v680, %v680
    %v895 = vpack.c.bf16 %v681, %v681
    %v896 = vpack.c.bf16 %v712, %v712
    %v897 = vpack.c.bf16 %v713, %v713
    %v898 = vpack.c.bf16 %v744, %v744
    %v899 = vpack.c.bf16 %v745, %v745
    %v900 = vpack.c.bf16 %v776, %v776
    %v901 = vpack.c.bf16 %v777, %v777
    %v902 = vpack.c.bf16 %v808, %v808
    %v903 = vpack.c.bf16 %v809, %v809
    %v904 = vpack.c.bf16 %v840, %v840
    %v905 = vpack.c.bf16 %v841, %v841
    %v906 = vpack.c.bf16 %v872, %v872
    %v907 = vpack.c.bf16 %v873, %v873
    %v928 = vunpack.c.l.b16 %v888
    %v929 = vunpack.c.l.b16 %v889
    %v930 = vunpack.c.l.b16 %v890
    %v931 = vunpack.c.l.b16 %v891
    %v932 = vunpack.c.l.b16 %v892
    %v933 = vunpack.c.l.b16 %v893
    %v934 = vunpack.c.l.b16 %v894
    %v935 = vunpack.c.l.b16 %v895
    %v936 = vunpack.c.l.b16 %v896
    %v937 = vunpack.c.l.b16 %v897
    %v938 = vunpack.c.l.b16 %v898
    %v939 = vunpack.c.l.b16 %v899
    %v940 = vunpack.c.l.b16 %v900
    %v941 = vunpack.c.l.b16 %v901
    %v942 = vunpack.c.l.b16 %v902
    %v943 = vunpack.c.l.b16 %v903
    %v944 = vunpack.c.l.b16 %v904
    %v945 = vunpack.c.l.b16 %v905
    %v946 = vunpack.c.l.b16 %v906
    %v947 = vunpack.c.l.b16 %v907
    %v948 = vpack.c.b16 %v929, %v928
    %v949 = vpack.c.b16 %v931, %v930
    %v950 = vpack.c.b16 %v933, %v932
    %v951 = vpack.c.b16 %v935, %v934
    %v952 = vpack.c.b16 %v937, %v936
    %v953 = vpack.c.b16 %v939, %v938
    %v954 = vpack.c.b16 %v941, %v940
    %v955 = vpack.c.b16 %v943, %v942
    %v956 = vpack.c.b16 %v945, %v944
    %v957 = vpack.c.b16 %v947, %v946
    %v960 = vunpack.c.l.b16 %v471
    %v961 = vunpack.c.l.b16 %v472
    %v962 = vpack.c.b16 %v961, %v960
    %v965 = vsel %vm326, %v948, 0
    %v968 = vsel %vm326, %v949, 0
    %v971 = vsel %vm326, %v950, 0
    %v974 = vsel %vm326, %v951, 0
    %v977 = vsel %vm326, %v952, 0
    %v980 = vsel %vm326, %v953, 0
    %v983 = vsel %vm326, %v954, 0
    %v986 = vsel %vm326, %v955, 0
    %v989 = vsel %vm326, %v956, 0
    %v992 = vsel %vm326, %v957, 0
    %994 = vmatpush.bf16.msra.mxu0 0
    %995 = vmatpush.bf16.msra.mxu0 0
    %996 = vmatpush.bf16.msra.mxu0 0
    %997 = vmatpush.bf16.msra.mxu0 0
    %998 = vmatpush.bf16.msra.mxu0 0
    %999 = vmatpush.bf16.msra.mxu0 0
    %1000 = vmatpush.bf16.msra.mxu0 0
    %1001 = vmatpush.bf16.msra.mxu0 %v962
    %1002 = vmatmul.bf16.gmra.mxu0 %v965
    %v1003 = vpop.f32.mrf.mxu0
    %v1004 = vadd.f32 0.0, %v1003
    %v1005 = vpop.f32.mrf.mxu0
    %v1006 = vadd.f32 0.0, %v1005
    %1007 = vmatmul.bf16.gmra.mxu0 %v968
    %v1008 = vpop.f32.mrf.mxu0
    %v1009 = vadd.f32 0.0, %v1008
    %v1010 = vpop.f32.mrf.mxu0
    %v1011 = vadd.f32 0.0, %v1010
    %1012 = vmatmul.bf16.gmra.mxu0 %v971
    %v1013 = vpop.f32.mrf.mxu0
    %v1014 = vadd.f32 0.0, %v1013
    %v1015 = vpop.f32.mrf.mxu0
    %v1016 = vadd.f32 0.0, %v1015
    %1017 = vmatmul.bf16.gmra.mxu0 %v974
    %v1018 = vpop.f32.mrf.mxu0
    %v1019 = vadd.f32 0.0, %v1018
    %v1020 = vpop.f32.mrf.mxu0
    %v1021 = vadd.f32 0.0, %v1020
    %1022 = vmatmul.bf16.gmra.mxu0 %v977
    %v1023 = vpop.f32.mrf.mxu0
    %v1024 = vadd.f32 0.0, %v1023
    %v1025 = vpop.f32.mrf.mxu0
    %v1026 = vadd.f32 0.0, %v1025
    %1027 = vmatmul.bf16.gmra.mxu0 %v980
    %v1028 = vpop.f32.mrf.mxu0
    %v1029 = vadd.f32 0.0, %v1028
    %v1030 = vpop.f32.mrf.mxu0
    %v1031 = vadd.f32 0.0, %v1030
    %1032 = vmatmul.bf16.gmra.mxu0 %v983
    %v1033 = vpop.f32.mrf.mxu0
    %v1034 = vadd.f32 0.0, %v1033
    %v1035 = vpop.f32.mrf.mxu0
    %v1036 = vadd.f32 0.0, %v1035
    %1037 = vmatmul.bf16.gmra.mxu0 %v986
    %v1038 = vpop.f32.mrf.mxu0
    %v1039 = vadd.f32 0.0, %v1038
    %v1040 = vpop.f32.mrf.mxu0
    %v1041 = vadd.f32 0.0, %v1040
    %1042 = vmatmul.bf16.gmra.mxu0 %v989
    %v1043 = vpop.f32.mrf.mxu0
    %v1044 = vadd.f32 0.0, %v1043
    %v1045 = vpop.f32.mrf.mxu0
    %v1046 = vadd.f32 0.0, %v1045
    %1047 = vmatmul.bf16.gmra.mxu0 %v992
    %v1048 = vpop.f32.mrf.mxu0
    %v1049 = vadd.f32 0.0, %v1048
    %v1050 = vpop.f32.mrf.mxu0
    %v1051 = vadd.f32 0.0, %v1050
    %1052 = vdwg.mxu0
    %v1053 = vmul.f32 %v1004, %v1004
    %v1054 = vmul.f32 %v1006, %v1006
    %v1055 = vmul.f32 %v1009, %v1009
    %v1056 = vmul.f32 %v1011, %v1011
    %v1057 = vmul.f32 %v1014, %v1014
    %v1058 = vmul.f32 %v1016, %v1016
    %v1059 = vmul.f32 %v1019, %v1019
    %v1060 = vmul.f32 %v1021, %v1021
    %v1061 = vmul.f32 %v1004, %v1014
    %v1062 = vmul.f32 %v1006, %v1016
    %v1063 = vmul.f32 %v1009, %v1019
    %v1064 = vmul.f32 %v1011, %v1021
    %v1065 = vsub.f32 %v1024, %v1053
    %v1066 = vsub.f32 %v1026, %v1054
    %v1067 = vsub.f32 %v1029, %v1055
    %v1068 = vsub.f32 %v1031, %v1056
    %v1069 = vsub.f32 %v1034, %v1057
    %v1070 = vsub.f32 %v1036, %v1058
    %v1071 = vsub.f32 %v1039, %v1059
    %v1072 = vsub.f32 %v1041, %v1060
    %v1073 = vsub.f32 %v1044, %v1061
    %v1074 = vsub.f32 %v1046, %v1062
    %v1075 = vsub.f32 %v1049, %v1063
    %v1076 = vsub.f32 %v1051, %v1064
    %v1077 = vmul.f32 %v1061, 2.0
    %v1078 = vmul.f32 %v1062, 2.0
    %v1079 = vmul.f32 %v1063, 2.0
    %v1080 = vmul.f32 %v1064, 2.0
    %v1081 = vadd.f32 %v1077, 0.0001
    %v1082 = vadd.f32 %v1078, 0.0001
    %v1083 = vadd.f32 %v1079, 0.0001
    %v1084 = vadd.f32 %v1080, 0.0001
    %v1085 = vmul.f32 %v1073, 2.0
    %v1086 = vmul.f32 %v1074, 2.0
    %v1087 = vmul.f32 %v1075, 2.0
    %v1088 = vmul.f32 %v1076, 2.0
    %v1089 = vadd.f32 %v1085, 0.0009
    %v1090 = vadd.f32 %v1086, 0.0009
    %v1091 = vadd.f32 %v1087, 0.0009
    %v1092 = vadd.f32 %v1088, 0.0009
    %v1093 = vmul.f32 %v1081, %v1089
    %v1094 = vmul.f32 %v1082, %v1090
    %v1095 = vmul.f32 %v1083, %v1091
    %v1096 = vmul.f32 %v1084, %v1092
    %v1097 = vadd.f32 %v1053, %v1057
    %v1098 = vadd.f32 %v1054, %v1058
    %v1099 = vadd.f32 %v1055, %v1059
    %v1100 = vadd.f32 %v1056, %v1060
    %v1101 = vadd.f32 %v1097, 0.0001
    %v1102 = vadd.f32 %v1098, 0.0001
    %v1103 = vadd.f32 %v1099, 0.0001
    %v1104 = vadd.f32 %v1100, 0.0001
    %v1105 = vadd.f32 %v1065, %v1069
    %v1106 = vadd.f32 %v1066, %v1070
    %v1107 = vadd.f32 %v1067, %v1071
    %v1108 = vadd.f32 %v1068, %v1072
    %v1109 = vadd.f32 %v1105, 0.0009
    %v1110 = vadd.f32 %v1106, 0.0009
    %v1111 = vadd.f32 %v1107, 0.0009
    %v1112 = vadd.f32 %v1108, 0.0009
    %v1113 = vmul.f32 %v1101, %v1109
    %v1114 = vmul.f32 %v1102, %v1110
    %v1115 = vmul.f32 %v1103, %v1111
    %v1116 = vmul.f32 %v1104, %v1112
    %v1117 = vrcp.pop %v1113
    %v1118 = vrcp.pop %v1114
    %v1119 = vrcp.pop %v1115
    %v1120 = vrcp.pop %v1116
    %v1121 = vmul.f32 %v1093, %v1117
    %v1122 = vmul.f32 %v1094, %v1118
    %v1123 = vmul.f32 %v1095, %v1119
    %v1124 = vmul.f32 %v1096, %v1120
    %v1125 = vsel %vm326, %v1121, 0.0
    %v1126 = vsel %vm326, %v1122, 0.0
    %v1127 = vadd.f32 %v1125, %v1126
    %v1128 = vsel %vm326, %v1123, 0.0
    %v1129 = vadd.f32 %v1127, %v1128
    %v1130 = vsel %vm326, %v1124, 0.0
    %v1131 = vadd.f32 %v1129, %v1130
    %1132 = vadd.xlane.f32.xlu0 %v1131
    %v1133 = vpop.xlane.xlu0 %1132
    %v1134 = vrot.slane %v1133, 4
    %v1135 = vadd.f32 %v1133, %v1134
    %v1136 = vrot.slane %v1135, 2
    %v1137 = vadd.f32 %v1135, %v1136
    %v1138 = vrot.slane %v1137, 1
    %v1139 = vadd.f32 %v1137, %v1138
    %s1140 = vtos %v1139
    %v1141 = vlaneseq
    %v1142 = vand.u32 %v1141, 127
    %vm1143 = vcmp.eq.s32.totalorder %v1142, 0
    %v1144 = vstv %s342
    %v1145 = vsel %vm1143, %v1144, 0.0
    %vm1146 = vcmp.eq.s32.totalorder %v1142, 1
    %v1147 = vstv %s362
    %v1148 = vsel %vm1146, %v1147, 0.0
    %v1149 = vadd.f32 %v1145, %v1148
    %vm1150 = vcmp.eq.s32.totalorder %v1142, 2
    %v1151 = vstv %s386
    %v1152 = vsel %vm1150, %v1151, 0.0
    %v1153 = vadd.f32 %v1149, %v1152
    %vm1154 = vcmp.eq.s32.totalorder %v1142, 3
    %v1155 = vstv %s1140
    %v1156 = vsel %vm1154, %v1155, 0.0
    %v1157 = vadd.f32 %v1153, %v1156
    %1158 = vst [vmem:[#allocation10] sm:$0xff] %v1157
    // Predicated region
    $region34: #{tpu_custom_call.1} parent=1 // pred_check
      _
    $region35: #{tpu_custom_call.1} parent=1 // pred_check_branch
      %1160 = sbr.rel (0) target = $region37
    $region36: #{tpu_custom_call.1} parent=1 // pred_region
      %1162 = vsyncadd [#allocation4], 0
      %s1164 = sshll.u32 [#allocation10], 4
      %s1165 = int_to_ptr.vmem [resolvable:$true] %s1164
      %s1166 = sshll.u32 %s4, 4
      %s1167 = int_to_ptr.hbm [resolvable:$true] %s1166
      %1169 = dma.vmem_to_hbm [thread:$0]  %s1165, 128, %s1167, [#allocation4]
    $region37: #{tpu_custom_call.1} parent=1 // pred_fallthru
      _
    // Predicated region
    $region38: #{tpu_custom_call.1} parent=1 // pred_check
      _
    $region39: #{tpu_custom_call.1} parent=1 // pred_check_branch
      %1171 = sbr.rel (0) target = $region41
    $region40: #{tpu_custom_call.1} parent=1 // pred_region
      %1173 = dma.done [#allocation4], 128
    $region41: #{tpu_custom_call.1} parent=1 // pred_fallthru
      _
    %1174 = vsyncpa [#allocation3], 1
    %1175 = vsyncpa [#allocation6], 1
    %1176 = vsyncpa [#allocation9], 1
    %1177 = vsyncpa [#allocation4], 1

</llo_original>
